<compile_context>
chip_gen: v6e
topology: v6e:2x2x1
jax: 0.10.0
libtpu: 0.0.40
codegen_flags: <defaults>
</compile_context>

<pallas_src>
import functools
import inspect

import jax
import jax.numpy as jnp
from jax.experimental import pallas as pl
from jax.experimental.pallas import tpu as pltpu

LANE = 128

try:
    _HAS_PIPELINE_MODE = (
        "pipeline_mode" in inspect.signature(pl.BlockSpec).parameters
        and hasattr(pl, "Buffered")
    )
except (TypeError, ValueError):  # pragma: no cover
    _HAS_PIPELINE_MODE = False


def _round_up(x, m):
    return ((x + m - 1) // m) * m


def _pad2(a, rows, cols):
    return jnp.pad(a, ((0, rows - a.shape[0]), (0, cols - a.shape[1])))


def _detect_num_tensorcores():
    """Best-effort TensorCores per JAX device (v7x/megacore: 2, v5e/v6e: 1)."""
    try:
        kind = jax.devices()[0].device_kind.lower()
    except Exception:
        return 1
    if "7" in kind or "v4" in kind or "v5p" in kind:
        return 2
    return 1


def _pan_kernel(x_ref, w1_ref, b1_ref, w2_ref, b2_ref, w3t_ref, b3_ref, o_ref):
    # fc1 + ReLU: (block_b, D) @ (D, H1p) — x read at its true feature width.
    w1 = w1_ref[...]
    x = x_ref[...].astype(w1.dtype)  # no-op for f32; bf16 path pre-casts x
    h1 = jnp.dot(x, w1, preferred_element_type=jnp.float32)
    h1 = jnp.maximum(h1 + b1_ref[...], 0.0)

    # fc2 + ReLU: (block_b, H1p) @ (H1p, H2p); padded lanes stay exactly zero.
    w2 = w2_ref[...]
    h2 = jnp.dot(h1.astype(w2.dtype), w2, preferred_element_type=jnp.float32)
    h2 = jnp.maximum(h2 + b2_ref[...], 0.0)

    # fc3, transposed: (Op, H2p) contracted with (block_b, H2p) on the feature
    # axis -> (Op, block_b).  Batch lands on the lane axis, so the output store
    # is lane-dense and only Op (=8) sublanes wide.
    w3t = w3t_ref[...]
    out_t = jax.lax.dot_general(
        w3t,
        h2.astype(w3t.dtype),
        dimension_numbers=(((1,), (1,)), ((), ())),
        preferred_element_type=jnp.float32,
    )
    o_ref[...] = (out_t + b3_ref[...]).astype(o_ref.dtype)


@functools.partial(
    jax.jit, static_argnames=("block_b", "use_bf16", "num_cores")
)
def pan_forward(x, w1, b1, w2, b2, w3, b3, *, block_b=2048, use_bf16=False,
                num_cores=None):
    """x: (B, input_size). Weights wN: (in, out); biases bN: (1, out)."""
    B, D = x.shape
    H1, H2, O = w1.shape[1], w2.shape[1], w3.shape[1]
    out_dtype = x.dtype

    # Hidden dims padded to 128 lanes; the tiny output only to 8 sublanes.
    H1p = _round_up(H1, LANE)
    H2p = _round_up(H2, LANE)
    Op = _round_up(O, 8)

    if num_cores is None:
        num_cores = _detect_num_tensorcores()

    # ---- batch tiling --------------------------------------------------
    # Big tiles amortize the ~0.35us grid-step overhead; per-step VMEM at
    # block_b=2048 is only ~3 MiB, far under every generation's scoped limit.
    block_b = _round_up(block_b, LANE)
    B8 = _round_up(B, 8)
    if B8 <= block_b:
        # Single tile (1-TC chips, or small batches): full batch in one step.
        block_b_eff = B8
    elif num_cores >= 2 and B8 <= num_cores * block_b:
        # 2-TC chips (v7x): split into equal 128-aligned tiles so the
        # "parallel" grid axis balances across TensorCores.
        block_b_eff = _round_up(pl.cdiv(B8, num_cores), LANE)
    else:
        block_b_eff = block_b
    grid_n = pl.cdiv(B8, block_b_eff)
    Bp = grid_n * block_b_eff

    # ---- operand prep (host side) ---------------------------------------
    w_dtype = jnp.bfloat16 if use_bf16 else x.dtype
    xp = jnp.pad(x, ((0, Bp - B), (0, 0))).astype(w_dtype)   # batch pad only
    w1p = _pad2(w1, D, H1p).astype(w_dtype)
    b1p = _pad2(b1, 1, H1p).astype(jnp.float32)
    w2p = _pad2(w2, H1p, H2p).astype(w_dtype)
    b2p = _pad2(b2, 1, H2p).astype(jnp.float32)
    # fc3 stored transposed, i.e. PyTorch's native (out, in) layout, padded to
    # (Op, H2p); bias stored as a (Op, 1) column for the transposed output.
    w3tp = _pad2(w3.T, Op, H2p).astype(w_dtype)
    b3tp = _pad2(b3.T, Op, 1).astype(jnp.float32)

    # ---- cost estimate (reflects unpadded x read + narrow output) -------
    w_isz = jnp.dtype(w_dtype).itemsize
    o_isz = jnp.dtype(out_dtype).itemsize
    flops = 2 * Bp * (D * H1p + H1p * H2p + H2p * Op)
    bytes_accessed = int(
        Bp * D * w_isz                       # x read
        + Op * Bp * o_isz                    # transposed narrow output write
        + (D * H1p + H1p * H2p + Op * H2p) * w_isz   # weights (resident)
        + (H1p + H2p + Op) * 4               # biases
    )

    rep2 = lambda i: (0, 0)  # weights/biases: one full block, grid-invariant

    x_spec_kwargs = {}
    if _HAS_PIPELINE_MODE and grid_n >= 3:
        # Deeper buffering on the x stream once the DMA is the exposed latency.
        x_spec_kwargs["pipeline_mode"] = pl.Buffered(3)

    in_specs = [
        pl.BlockSpec((block_b_eff, D), lambda i: (i, 0), **x_spec_kwargs),  # x
        pl.BlockSpec((D, H1p), rep2),    # w1
        pl.BlockSpec((1, H1p), rep2),    # b1
        pl.BlockSpec((H1p, H2p), rep2),  # w2
        pl.BlockSpec((1, H2p), rep2),    # b2
        pl.BlockSpec((Op, H2p), rep2),   # w3 (transposed / PyTorch layout)
        pl.BlockSpec((Op, 1), rep2),     # b3 (column)
    ]
    out_spec = pl.BlockSpec((Op, block_b_eff), lambda i: (0, i))

    out_t = pl.pallas_call(
        _pan_kernel,
        out_shape=jax.ShapeDtypeStruct((Op, Bp), out_dtype),
        grid_spec=pltpu.PrefetchScalarGridSpec(
            num_scalar_prefetch=0,
            grid=(grid_n,),
            in_specs=in_specs,
            out_specs=out_spec,
        ),
        compiler_params=pltpu.CompilerParams(
            dimension_semantics=("parallel",),
        ),
        cost_estimate=pl.CostEstimate(
            flops=flops, transcendentals=0, bytes_accessed=bytes_accessed
        ),
    )(xp, w1p, b1p, w2p, b2p, w3tp, b3tp)

    # (Op, Bp) -> (B, O): strip zero-padded output rows / batch padding and
    # un-transpose (trivial on a (2, B) array).
    return out_t[:O, :B].T.astype(out_dtype)


def init_pan_params(key, input_size):
    """Deterministic init matching PyTorch nn.Linear shapes.

    PyTorch stores weight as (out, in); we store the transpose (in, out) so
    the kernel computes x @ W + b == x @ W_pt.T + b.
    """
    dims = [(input_size, 80), (80, 60), (60, 2)]
    params = []
    for i, (fan_in, fan_out) in enumerate(dims):
        kw, kb = jax.random.split(jax.random.fold_in(key, i))
        bound = 1.0 / jnp.sqrt(fan_in)
        w = jax.random.uniform(kw, (fan_in, fan_out), jnp.float32, -bound, bound)
        b = jax.random.uniform(kb, (1, fan_out), jnp.float32, -bound, bound)
        params += [w, b]
    return params


def pan_reference(x, w1, b1, w2, b2, w3, b3):
    h = jnp.maximum(x @ w1 + b1, 0.0)
    h = jnp.maximum(h @ w2 + b2, 0.0)
    return h @ w3 + b3


if __name__ == "__main__":
    key = jax.random.PRNGKey(0)
    batch, input_size = 50, 32  # non-multiple batch exercises the padding path

    kx, kp = jax.random.split(key)
    x = jax.random.normal(kx, (batch, input_size), jnp.float32)
    w1, b1, w2, b2, w3, b3 = init_pan_params(kp, input_size)

    ref = pan_reference(x, w1, b1, w2, b2, w3, b3)

    # f32 path: bit-accurate vs the reference at tight tolerance.
    out = jax.block_until_ready(pan_forward(x, w1, b1, w2, b2, w3, b3))
    assert out.shape == (batch, 2), out.shape
    assert jnp.allclose(out, ref, atol=1e-5, rtol=1e-5), "f32 mismatch vs reference"

    # bf16-operand fast path (v5e/v6e MXU win): drifts at ~bf16 precision,
    # checked with a correspondingly loose tolerance.
    out_bf16 = jax.block_until_ready(
        pan_forward(x, w1, b1, w2, b2, w3, b3, use_bf16=True)
    )
    assert out_bf16.shape == (batch, 2), out_bf16.shape
    assert jnp.allclose(out_bf16, ref, atol=5e-2, rtol=5e-2), "bf16 mismatch vs reference"

    print("KERNEL_OK")
</pallas_src>

<mosaic_0001>
module attributes {stable_mosaic.version = 11 : i64} {
  func.func @_pan_kernel(%arg0: i32, %arg1: memref<56x32xf32, #tpu.memory_space<vmem>>, %arg2: memref<32x128xf32, #tpu.memory_space<vmem>>, %arg3: memref<1x128xf32, #tpu.memory_space<vmem>>, %arg4: memref<128x128xf32, #tpu.memory_space<vmem>>, %arg5: memref<1x128xf32, #tpu.memory_space<vmem>>, %arg6: memref<8x128xf32, #tpu.memory_space<vmem>>, %arg7: memref<8x1xf32, #tpu.memory_space<vmem>>, %arg8: memref<8x56xf32, #tpu.memory_space<vmem>>) attributes {dimension_semantics = [#tpu.dimension_semantics<parallel>], iteration_bounds = array<i64: 1>, scalar_prefetch = 0 : i64, scratch_operands = 0 : i64, tpu.core_type = #tpu.core_type<tc>, window_params = [{transform_indices = @transform_0, window_bounds = array<i64: 56, 32>}, {pipeline_mode = #tpu.pipeline_mode<synchronous>, transform_indices = @transform_1, window_bounds = array<i64: 32, 128>}, {pipeline_mode = #tpu.pipeline_mode<synchronous>, transform_indices = @transform_2, window_bounds = array<i64: 1, 128>}, {pipeline_mode = #tpu.pipeline_mode<synchronous>, transform_indices = @transform_3, window_bounds = array<i64: 128, 128>}, {pipeline_mode = #tpu.pipeline_mode<synchronous>, transform_indices = @transform_4, window_bounds = array<i64: 1, 128>}, {pipeline_mode = #tpu.pipeline_mode<synchronous>, transform_indices = @transform_5, window_bounds = array<i64: 8, 128>}, {pipeline_mode = #tpu.pipeline_mode<synchronous>, transform_indices = @transform_6, window_bounds = array<i64: 8, 1>}, {transform_indices = @transform_7, window_bounds = array<i64: 8, 56>}]} {
    %c0 = arith.constant 0 : index
    %c0_0 = arith.constant 0 : index
    %0 = vector.load %arg2[%c0, %c0_0] : memref<32x128xf32, #tpu.memory_space<vmem>>, vector<32x128xf32>
    %c0_1 = arith.constant 0 : index
    %c0_2 = arith.constant 0 : index
    %1 = vector.load %arg1[%c0_1, %c0_2] : memref<56x32xf32, #tpu.memory_space<vmem>>, vector<56x32xf32>
    %cst = arith.constant dense<0.000000e+00> : vector<56x128xf32>
    %2 = tpu.matmul %1, %0, %cst {dimension_numbers = #tpu.dot_dimension_numbers<[1], [0], [0], [1], [0, 0, 1, 1], [], []>} : vector<56x32xf32>, vector<32x128xf32>, vector<56x128xf32> -> vector<56x128xf32>
    %c0_3 = arith.constant 0 : index
    %c0_4 = arith.constant 0 : index
    %3 = vector.load %arg3[%c0_3, %c0_4] : memref<1x128xf32, #tpu.memory_space<vmem>>, vector<1x128xf32>
    %4 = vector.broadcast %3 : vector<1x128xf32> to vector<56x128xf32>
    %5 = arith.addf %2, %4 : vector<56x128xf32>
    %cst_5 = arith.constant 0.000000e+00 : f32
    %6 = vector.broadcast %cst_5 : f32 to vector<56x128xf32>
    %7 = arith.maximumf %5, %6 : vector<56x128xf32>
    %c0_6 = arith.constant 0 : index
    %c0_7 = arith.constant 0 : index
    %8 = vector.load %arg4[%c0_6, %c0_7] : memref<128x128xf32, #tpu.memory_space<vmem>>, vector<128x128xf32>
    %cst_8 = arith.constant dense<0.000000e+00> : vector<56x128xf32>
    %9 = tpu.matmul %7, %8, %cst_8 {dimension_numbers = #tpu.dot_dimension_numbers<[1], [0], [0], [1], [0, 0, 1, 1], [], []>} : vector<56x128xf32>, vector<128x128xf32>, vector<56x128xf32> -> vector<56x128xf32>
    %c0_9 = arith.constant 0 : index
    %c0_10 = arith.constant 0 : index
    %10 = vector.load %arg5[%c0_9, %c0_10] : memref<1x128xf32, #tpu.memory_space<vmem>>, vector<1x128xf32>
    %11 = vector.broadcast %10 : vector<1x128xf32> to vector<56x128xf32>
    %12 = arith.addf %9, %11 : vector<56x128xf32>
    %cst_11 = arith.constant 0.000000e+00 : f32
    %13 = vector.broadcast %cst_11 : f32 to vector<56x128xf32>
    %14 = arith.maximumf %12, %13 : vector<56x128xf32>
    %c0_12 = arith.constant 0 : index
    %c0_13 = arith.constant 0 : index
    %15 = vector.load %arg6[%c0_12, %c0_13] : memref<8x128xf32, #tpu.memory_space<vmem>>, vector<8x128xf32>
    %cst_14 = arith.constant dense<0.000000e+00> : vector<8x56xf32>
    %16 = tpu.matmul %15, %14, %cst_14 {dimension_numbers = #tpu.dot_dimension_numbers<[1], [1], [0], [0], [0, 0, 1, 0], [], []>} : vector<8x128xf32>, vector<56x128xf32>, vector<8x56xf32> -> vector<8x56xf32>
    %c0_15 = arith.constant 0 : index
    %c0_16 = arith.constant 0 : index
    %17 = vector.load %arg7[%c0_15, %c0_16] : memref<8x1xf32, #tpu.memory_space<vmem>>, vector<8x1xf32>
    %18 = vector.broadcast %17 : vector<8x1xf32> to vector<8x56xf32>
    %19 = arith.addf %16, %18 : vector<8x56xf32>
    %c0_17 = arith.constant 0 : index
    %c0_18 = arith.constant 0 : index
    %20 = vector.load %arg8[%c0_17, %c0_18] : memref<8x56xf32, #tpu.memory_space<vmem>>, vector<8x56xf32>
    tpu.vector_store %arg8[%c0_17, %c0_18], %19 {strides = array<i32>} : memref<8x56xf32, #tpu.memory_space<vmem>>, vector<8x56xf32>,
    return
  }
  func.func @transform_0(%arg0: i32) -> (i32, i32) {
    %c0_i32 = arith.constant 0 : i32
    %c0_i32_0 = arith.constant 0 : i32
    return %arg0, %c0_i32 : i32, i32
  }
  func.func @transform_1(%arg0: i32) -> (i32, i32) {
    %c0_i32 = arith.constant 0 : i32
    %c0_i32_0 = arith.constant 0 : i32
    %c0_i32_1 = arith.constant 0 : i32
    return %c0_i32, %c0_i32_0 : i32, i32
  }
  func.func @transform_2(%arg0: i32) -> (i32, i32) {
    %c0_i32 = arith.constant 0 : i32
    %c0_i32_0 = arith.constant 0 : i32
    %c0_i32_1 = arith.constant 0 : i32
    return %c0_i32, %c0_i32_0 : i32, i32
  }
  func.func @transform_3(%arg0: i32) -> (i32, i32) {
    %c0_i32 = arith.constant 0 : i32
    %c0_i32_0 = arith.constant 0 : i32
    %c0_i32_1 = arith.constant 0 : i32
    return %c0_i32, %c0_i32_0 : i32, i32
  }
  func.func @transform_4(%arg0: i32) -> (i32, i32) {
    %c0_i32 = arith.constant 0 : i32
    %c0_i32_0 = arith.constant 0 : i32
    %c0_i32_1 = arith.constant 0 : i32
    return %c0_i32, %c0_i32_0 : i32, i32
  }
  func.func @transform_5(%arg0: i32) -> (i32, i32) {
    %c0_i32 = arith.constant 0 : i32
    %c0_i32_0 = arith.constant 0 : i32
    %c0_i32_1 = arith.constant 0 : i32
    return %c0_i32, %c0_i32_0 : i32, i32
  }
  func.func @transform_6(%arg0: i32) -> (i32, i32) {
    %c0_i32 = arith.constant 0 : i32
    %c0_i32_0 = arith.constant 0 : i32
    %c0_i32_1 = arith.constant 0 : i32
    return %c0_i32, %c0_i32_0 : i32, i32
  }
  func.func @transform_7(%arg0: i32) -> (i32, i32) {
    %c0_i32 = arith.constant 0 : i32
    %c0_i32_0 = arith.constant 0 : i32
    return %c0_i32, %arg0 : i32, i32
  }
}

</mosaic_0001>

<llo_original>
// kernel: pan_forward.1
$region0: #{pan_forward.1}
  #allocation0 [shape = 'u32[]', space=smem, size = 0x4, offset = 0x4, fixed_abs, tag = 'smem constant byte address 0x4 - core index']
  #allocation1 [shape = 'u32[144,128]{1,0:T(1,128)}', space=vmem, size = 0x12000, scoped, tag = 'internal scratch']
  %s0 = inlined_call_operand.vmem [shape: f32[56,32], index: 0, kind: input, shape index: {}]
  %s1 = inlined_call_operand.vmem [shape: f32[32,128], index: 1, kind: input, shape index: {}]
  %s2 = inlined_call_operand.vmem [shape: f32[1,128], index: 2, kind: input, shape index: {}]
  %s3 = inlined_call_operand.vmem [shape: f32[128,128], index: 3, kind: input, shape index: {}]
  %s4 = inlined_call_operand.vmem [shape: f32[1,128], index: 4, kind: input, shape index: {}]
  %s5 = inlined_call_operand.vmem [shape: f32[8,128], index: 5, kind: input, shape index: {}]
  %s6 = inlined_call_operand.vmem [shape: f32[8,1], index: 6, kind: input, shape index: {}]
  %s7 = inlined_call_operand.vmem [shape: f32[8,56], index: 7, kind: output, shape index: {}]
  %s8 = sld [smem:[#allocation0]]
  $region38: #{pan_forward.1} parent=0
    _
  %s10 = ssub.s32 1, %s8
  %s11 = scalar_select 0, %s10, %s8
  // Predicated region
  $region2: #{pan_forward.1} parent=0 // pred_check
    _
  $region3: #{pan_forward.1} parent=0 // pred_check_branch
    %13 = sbr.rel (0) target = $region5
  $region4: #{pan_forward.1} parent=0 // pred_region
    _
  $region5: #{pan_forward.1} parent=0 // pred_fallthru
    _
  // Predicated region
  $region6: #{pan_forward.1} parent=0 // pred_check
    _
  $region7: #{pan_forward.1} parent=0 // pred_check_branch
    %15 = sbr.rel (0) target = $region9
  $region8: #{pan_forward.1} parent=0 // pred_region
    _
  $region9: #{pan_forward.1} parent=0 // pred_fallthru
    _
  // Predicated region
  $region10: #{pan_forward.1} parent=0 // pred_check
    _
  $region11: #{pan_forward.1} parent=0 // pred_check_branch
    %17 = sbr.rel (0) target = $region13
  $region12: #{pan_forward.1} parent=0 // pred_region
    _
  $region13: #{pan_forward.1} parent=0 // pred_fallthru
    _
  // Predicated region
  $region14: #{pan_forward.1} parent=0 // pred_check
    _
  $region15: #{pan_forward.1} parent=0 // pred_check_branch
    %19 = sbr.rel (0) target = $region17
  $region16: #{pan_forward.1} parent=0 // pred_region
    _
  $region17: #{pan_forward.1} parent=0 // pred_fallthru
    _
  // Predicated region
  $region18: #{pan_forward.1} parent=0 // pred_check
    _
  $region19: #{pan_forward.1} parent=0 // pred_check_branch
    %21 = sbr.rel (0) target = $region21
  $region20: #{pan_forward.1} parent=0 // pred_region
    _
  $region21: #{pan_forward.1} parent=0 // pred_fallthru
    _
  // Predicated region
  $region22: #{pan_forward.1} parent=0 // pred_check
    _
  $region23: #{pan_forward.1} parent=0 // pred_check_branch
    %23 = sbr.rel (0) target = $region25
  $region24: #{pan_forward.1} parent=0 // pred_region
    _
  $region25: #{pan_forward.1} parent=0 // pred_fallthru
    _
  // Predicated region
  $region26: #{pan_forward.1} parent=0 // pred_check
    _
  $region27: #{pan_forward.1} parent=0 // pred_check_branch
    %25 = sbr.rel (0) target = $region29
  $region28: #{pan_forward.1} parent=0 // pred_region
    _
  $region29: #{pan_forward.1} parent=0 // pred_fallthru
    _
  %v26 = vld [vmem:[%s1] sm:$0xff]
  %v27 = vld [vmem:[%s1 + $0x8] sm:$0xff]
  %v28 = vld [vmem:[%s1 + $0x10] sm:$0xff]
  %v29 = vld [vmem:[%s1 + $0x18] sm:$0xff]
  %v30 = vld [vmem:[%s0] sm:$0xff]
  %v31 = vld [vmem:[%s0 + $0x8] sm:$0xff]
  %v32 = vld [vmem:[%s0 + $0x10] sm:$0xff]
  %v33 = vld [vmem:[%s0 + $0x18] sm:$0xff]
  %v34 = vld [vmem:[%s0 + $0x20] sm:$0xff]
  %v35 = vld [vmem:[%s0 + $0x28] sm:$0xff]
  %v36 = vld [vmem:[%s0 + $0x30] sm:$0xff]
  %v37 = vld [vmem:[%s2] sm:$0x1]
  %v39 = vlaneseq
  %v40 = vshrl.u32 %v39, 7
  %v41 = vsub.s32 0, %v40
  %v42 = vrot.slane %v37, %v41
  %vm44 = vcmask 261120
  %v46 = vsel %vm44, %v30, 0
  %v49 = vsel %vm44, %v31, 0
  %v52 = vsel %vm44, %v32, 0
  %v55 = vsel %vm44, %v33, 0
  %v58 = vsel %vm44, %v34, 0
  %v61 = vsel %vm44, %v35, 0
  %v64 = vsel %vm44, %v36, 0
  %66 = vmatprep.subr.mxu0 0.0
  %67 = vmatpush1.msra.mxu0 0.0
  %68 = vmatprep.subr.mxu0 0.0
  %69 = vmatpush1.msra.mxu0 0.0
  %70 = vmatprep.subr.mxu0 0.0
  %71 = vmatpush1.msra.mxu0 0.0
  %72 = vmatprep.subr.mxu0 0.0
  %73 = vmatpush1.msra.mxu0 0.0
  %74 = vmatprep.subr.mxu0 0.0
  %75 = vmatpush1.msra.mxu0 0.0
  %76 = vmatprep.subr.mxu0 0.0
  %77 = vmatpush1.msra.mxu0 0.0
  %78 = vmatprep.subr.mxu0 0.0
  %79 = vmatpush1.msra.mxu0 0.0
  %80 = vmatprep.subr.mxu0 0.0
  %81 = vmatpush1.msra.mxu0 0.0
  %82 = vmatprep.subr.mxu0 0.0
  %83 = vmatpush1.msra.mxu0 0.0
  %84 = vmatprep.subr.mxu0 0.0
  %85 = vmatpush1.msra.mxu0 0.0
  %86 = vmatprep.subr.mxu0 0.0
  %87 = vmatpush1.msra.mxu0 0.0
  %88 = vmatprep.subr.mxu0 0.0
  %89 = vmatpush1.msra.mxu0 0.0
  %90 = vmatprep.subr.mxu0 0.0
  %91 = vmatpush1.msra.mxu0 %v29
  %92 = vmatprep.subr.mxu0 0.0
  %93 = vmatpush1.msra.mxu0 %v28
  %94 = vmatprep.subr.mxu0 0.0
  %95 = vmatpush1.msra.mxu0 %v27
  %96 = vmatprep.subr.mxu0 0.0
  %97 = vmatpush1.msra.mxu0 %v26
  %98 = vmatprep.subr.mxu0 0.0
  %99 = vmatpush2.msra.mxu0 0.0
  %100 = vmatprep.subr.mxu0 0.0
  %101 = vmatpush2.msra.mxu0 0.0
  %102 = vmatprep.subr.mxu0 0.0
  %103 = vmatpush2.msra.mxu0 0.0
  %104 = vmatprep.subr.mxu0 0.0
  %105 = vmatpush2.msra.mxu0 0.0
  %106 = vmatprep.subr.mxu0 0.0
  %107 = vmatpush2.msra.mxu0 0.0
  %108 = vmatprep.subr.mxu0 0.0
  %109 = vmatpush2.msra.mxu0 0.0
  %110 = vmatprep.subr.mxu0 0.0
  %111 = vmatpush2.msra.mxu0 0.0
  %112 = vmatprep.subr.mxu0 0.0
  %113 = vmatpush2.msra.mxu0 0.0
  %114 = vmatprep.subr.mxu0 0.0
  %115 = vmatpush2.msra.mxu0 0.0
  %116 = vmatprep.subr.mxu0 0.0
  %117 = vmatpush2.msra.mxu0 0.0
  %118 = vmatprep.subr.mxu0 0.0
  %119 = vmatpush2.msra.mxu0 0.0
  %120 = vmatprep.subr.mxu0 0.0
  %121 = vmatpush2.msra.mxu0 0.0
  %122 = vmatprep.subr.mxu0 0.0
  %123 = vmatpush2.msra.mxu0 0.0
  %124 = vmatprep.subr.mxu0 0.0
  %125 = vmatpush2.msra.mxu0 0.0
  %126 = vmatprep.subr.mxu0 0.0
  %127 = vmatpush2.msra.mxu0 0.0
  %128 = vmatprep.subr.mxu0 0.0
  %129 = vmatpush2.msra.mxu0 0.0
  %130 = vmatprep.mubr.f32.mxu0 0.0
  %131 = vmatmul.mubr.f32.gmra.mxu0 %v46
  %v132 = vpop.f32.mrf.mxu0
  %v133 = vadd.f32 %v42, %v132
  %v134 = vpop.f32.mrf.mxu0
  %135 = vmatprep.mubr.f32.mxu0 0.0
  %136 = vmatmul.mubr.f32.gmra.mxu0 %v49
  %v137 = vpop.f32.mrf.mxu0
  %v138 = vadd.f32 %v42, %v137
  %v139 = vpop.f32.mrf.mxu0
  %140 = vmatprep.mubr.f32.mxu0 0.0
  %141 = vmatmul.mubr.f32.gmra.mxu0 %v52
  %v142 = vpop.f32.mrf.mxu0
  %v143 = vadd.f32 %v42, %v142
  %v144 = vpop.f32.mrf.mxu0
  %145 = vmatprep.mubr.f32.mxu0 0.0
  %146 = vmatmul.mubr.f32.gmra.mxu0 %v55
  %v147 = vpop.f32.mrf.mxu0
  %v148 = vadd.f32 %v42, %v147
  %v149 = vpop.f32.mrf.mxu0
  %150 = vmatprep.mubr.f32.mxu0 0.0
  %151 = vmatmul.mubr.f32.gmra.mxu0 %v58
  %v152 = vpop.f32.mrf.mxu0
  %v153 = vadd.f32 %v42, %v152
  %v154 = vpop.f32.mrf.mxu0
  %155 = vmatprep.mubr.f32.mxu0 0.0
  %156 = vmatmul.mubr.f32.gmra.mxu0 %v61
  %v157 = vpop.f32.mrf.mxu0
  %v158 = vadd.f32 %v42, %v157
  %v159 = vpop.f32.mrf.mxu0
  %160 = vmatprep.mubr.f32.mxu0 0.0
  %161 = vmatmul.mubr.f32.gmra.mxu0 %v64
  %v162 = vpop.f32.mrf.mxu0
  %v163 = vadd.f32 %v42, %v162
  %v164 = vpop.f32.mrf.mxu0
  %165 = vdwg.mxu0
  %v166 = vmax.f32 %v133, 0.0
  %v167 = vmax.f32 %v138, 0.0
  %v168 = vmax.f32 %v143, 0.0
  %v169 = vmax.f32 %v148, 0.0
  %v170 = vmax.f32 %v153, 0.0
  %v171 = vmax.f32 %v158, 0.0
  %v172 = vmax.f32 %v163, 0.0
  %v173 = vld [vmem:[%s3] sm:$0xff]
  %v174 = vld [vmem:[%s3 + $0x8] sm:$0xff]
  %v175 = vld [vmem:[%s3 + $0x10] sm:$0xff]
  %v176 = vld [vmem:[%s3 + $0x18] sm:$0xff]
  %v177 = vld [vmem:[%s3 + $0x20] sm:$0xff]
  %v178 = vld [vmem:[%s3 + $0x28] sm:$0xff]
  %v179 = vld [vmem:[%s3 + $0x30] sm:$0xff]
  %v180 = vld [vmem:[%s3 + $0x38] sm:$0xff]
  %v181 = vld [vmem:[%s3 + $0x40] sm:$0xff]
  %v182 = vld [vmem:[%s3 + $0x48] sm:$0xff]
  %v183 = vld [vmem:[%s3 + $0x50] sm:$0xff]
  %v184 = vld [vmem:[%s3 + $0x58] sm:$0xff]
  %v185 = vld [vmem:[%s3 + $0x60] sm:$0xff]
  %v186 = vld [vmem:[%s3 + $0x68] sm:$0xff]
  %v187 = vld [vmem:[%s3 + $0x70] sm:$0xff]
  %v188 = vld [vmem:[%s3 + $0x78] sm:$0xff]
  %v189 = vld [vmem:[%s4] sm:$0x1]
  %v191 = vlaneseq
  %v192 = vshrl.u32 %v191, 7
  %v193 = vsub.s32 0, %v192
  %v194 = vrot.slane %v189, %v193
  %196 = vmatprep.subr.mxu0 0.0
  %197 = vmatpush1.msra.mxu0 %v188
  %198 = vmatprep.subr.mxu0 0.0
  %199 = vmatpush1.msra.mxu0 %v187
  %200 = vmatprep.subr.mxu0 0.0
  %201 = vmatpush1.msra.mxu0 %v186
  %202 = vmatprep.subr.mxu0 0.0
  %203 = vmatpush1.msra.mxu0 %v185
  %204 = vmatprep.subr.mxu0 0.0
  %205 = vmatpush1.msra.mxu0 %v184
  %206 = vmatprep.subr.mxu0 0.0
  %207 = vmatpush1.msra.mxu0 %v183
  %208 = vmatprep.subr.mxu0 0.0
  %209 = vmatpush1.msra.mxu0 %v182
  %210 = vmatprep.subr.mxu0 0.0
  %211 = vmatpush1.msra.mxu0 %v181
  %212 = vmatprep.subr.mxu0 0.0
  %213 = vmatpush1.msra.mxu0 %v180
  %214 = vmatprep.subr.mxu0 0.0
  %215 = vmatpush1.msra.mxu0 %v179
  %216 = vmatprep.subr.mxu0 0.0
  %217 = vmatpush1.msra.mxu0 %v178
  %218 = vmatprep.subr.mxu0 0.0
  %219 = vmatpush1.msra.mxu0 %v177
  %220 = vmatprep.subr.mxu0 0.0
  %221 = vmatpush1.msra.mxu0 %v176
  %222 = vmatprep.subr.mxu0 0.0
  %223 = vmatpush1.msra.mxu0 %v175
  %224 = vmatprep.subr.mxu0 0.0
  %225 = vmatpush1.msra.mxu0 %v174
  %226 = vmatprep.subr.mxu0 0.0
  %227 = vmatpush1.msra.mxu0 %v173
  %228 = vmatprep.subr.mxu0 0.0
  %229 = vmatpush2.msra.mxu0 0.0
  %230 = vmatprep.subr.mxu0 0.0
  %231 = vmatpush2.msra.mxu0 0.0
  %232 = vmatprep.subr.mxu0 0.0
  %233 = vmatpush2.msra.mxu0 0.0
  %234 = vmatprep.subr.mxu0 0.0
  %235 = vmatpush2.msra.mxu0 0.0
  %236 = vmatprep.subr.mxu0 0.0
  %237 = vmatpush2.msra.mxu0 0.0
  %238 = vmatprep.subr.mxu0 0.0
  %239 = vmatpush2.msra.mxu0 0.0
  %240 = vmatprep.subr.mxu0 0.0
  %241 = vmatpush2.msra.mxu0 0.0
  %242 = vmatprep.subr.mxu0 0.0
  %243 = vmatpush2.msra.mxu0 0.0
  %244 = vmatprep.subr.mxu0 0.0
  %245 = vmatpush2.msra.mxu0 0.0
  %246 = vmatprep.subr.mxu0 0.0
  %247 = vmatpush2.msra.mxu0 0.0
  %248 = vmatprep.subr.mxu0 0.0
  %249 = vmatpush2.msra.mxu0 0.0
  %250 = vmatprep.subr.mxu0 0.0
  %251 = vmatpush2.msra.mxu0 0.0
  %252 = vmatprep.subr.mxu0 0.0
  %253 = vmatpush2.msra.mxu0 0.0
  %254 = vmatprep.subr.mxu0 0.0
  %255 = vmatpush2.msra.mxu0 0.0
  %256 = vmatprep.subr.mxu0 0.0
  %257 = vmatpush2.msra.mxu0 0.0
  %258 = vmatprep.subr.mxu0 0.0
  %259 = vmatpush2.msra.mxu0 0.0
  %260 = vmatprep.mubr.f32.mxu0 0.0
  %261 = vmatmul.mubr.f32.gmra.mxu0 %v166
  %v262 = vpop.f32.mrf.mxu0
  %v263 = vadd.f32 %v194, %v262
  %v264 = vpop.f32.mrf.mxu0
  %265 = vmatprep.mubr.f32.mxu0 0.0
  %266 = vmatmul.mubr.f32.gmra.mxu0 %v167
  %v267 = vpop.f32.mrf.mxu0
  %v268 = vadd.f32 %v194, %v267
  %v269 = vpop.f32.mrf.mxu0
  %270 = vmatprep.mubr.f32.mxu0 0.0
  %271 = vmatmul.mubr.f32.gmra.mxu0 %v168
  %v272 = vpop.f32.mrf.mxu0
  %v273 = vadd.f32 %v194, %v272
  %v274 = vpop.f32.mrf.mxu0
  %275 = vmatprep.mubr.f32.mxu0 0.0
  %276 = vmatmul.mubr.f32.gmra.mxu0 %v169
  %v277 = vpop.f32.mrf.mxu0
  %v278 = vadd.f32 %v194, %v277
  %v279 = vpop.f32.mrf.mxu0
  %280 = vmatprep.mubr.f32.mxu0 0.0
  %281 = vmatmul.mubr.f32.gmra.mxu0 %v170
  %v282 = vpop.f32.mrf.mxu0
  %v283 = vadd.f32 %v194, %v282
  %v284 = vpop.f32.mrf.mxu0
  %285 = vmatprep.mubr.f32.mxu0 0.0
  %286 = vmatmul.mubr.f32.gmra.mxu0 %v171
  %v287 = vpop.f32.mrf.mxu0
  %v288 = vadd.f32 %v194, %v287
  %v289 = vpop.f32.mrf.mxu0
  %290 = vmatprep.mubr.f32.mxu0 0.0
  %291 = vmatmul.mubr.f32.gmra.mxu0 %v172
  %v292 = vpop.f32.mrf.mxu0
  %v293 = vadd.f32 %v194, %v292
  %v294 = vpop.f32.mrf.mxu0
  %295 = vdwg.mxu0
  %v296 = vmax.f32 %v263, 0.0
  %v297 = vmax.f32 %v268, 0.0
  %v298 = vmax.f32 %v273, 0.0
  %v299 = vmax.f32 %v278, 0.0
  %v300 = vmax.f32 %v283, 0.0
  %v301 = vmax.f32 %v288, 0.0
  %v302 = vmax.f32 %v293, 0.0
  %v303 = vld [vmem:[%s5] sm:$0xff]
  %v304 = vld [vmem:[%s6] sm:$0xff]
  %306 = vset.pattern.permute.xlu0 0
  %307 = vperm.xlu0 %306, %v304
  %v308 = vpop.permute.xlu0 %307
  %310 = vmatprep.subr.mxu0 0.0
  %311 = vmatpush1.xpose.msra.mxu0 0.0
  %312 = vmatprep.subr.mxu0 0.0
  %313 = vmatpush1.xpose.msra.mxu0 0.0
  %314 = vmatprep.subr.mxu0 0.0
  %315 = vmatpush1.xpose.msra.mxu0 0.0
  %316 = vmatprep.subr.mxu0 0.0
  %317 = vmatpush1.xpose.msra.mxu0 0.0
  %318 = vmatprep.subr.mxu0 0.0
  %319 = vmatpush1.xpose.msra.mxu0 0.0
  %320 = vmatprep.subr.mxu0 0.0
  %321 = vmatpush1.xpose.msra.mxu0 0.0
  %322 = vmatprep.subr.mxu0 0.0
  %323 = vmatpush1.xpose.msra.mxu0 0.0
  %324 = vmatprep.subr.mxu0 0.0
  %325 = vmatpush1.xpose.msra.mxu0 0.0
  %326 = vmatprep.subr.mxu0 0.0
  %327 = vmatpush1.xpose.msra.mxu0 0.0
  %328 = vmatprep.subr.mxu0 0.0
  %329 = vmatpush1.xpose.msra.mxu0 %v302
  %330 = vmatprep.subr.mxu0 0.0
  %331 = vmatpush1.xpose.msra.mxu0 %v301
  %332 = vmatprep.subr.mxu0 0.0
  %333 = vmatpush1.xpose.msra.mxu0 %v300
  %334 = vmatprep.subr.mxu0 0.0
  %335 = vmatpush1.xpose.msra.mxu0 %v299
  %336 = vmatprep.subr.mxu0 0.0
  %337 = vmatpush1.xpose.msra.mxu0 %v298
  %338 = vmatprep.subr.mxu0 0.0
  %339 = vmatpush1.xpose.msra.mxu0 %v297
  %340 = vmatprep.subr.mxu0 0.0
  %341 = vmatpush1.xpose.msra.mxu0 %v296
  %342 = vmatprep.subr.mxu0 0.0
  %343 = vmatpush2.xpose.msra.mxu0 0.0
  %344 = vmatprep.subr.mxu0 0.0
  %345 = vmatpush2.xpose.msra.mxu0 0.0
  %346 = vmatprep.subr.mxu0 0.0
  %347 = vmatpush2.xpose.msra.mxu0 0.0
  %348 = vmatprep.subr.mxu0 0.0
  %349 = vmatpush2.xpose.msra.mxu0 0.0
  %350 = vmatprep.subr.mxu0 0.0
  %351 = vmatpush2.xpose.msra.mxu0 0.0
  %352 = vmatprep.subr.mxu0 0.0
  %353 = vmatpush2.xpose.msra.mxu0 0.0
  %354 = vmatprep.subr.mxu0 0.0
  %355 = vmatpush2.xpose.msra.mxu0 0.0
  %356 = vmatprep.subr.mxu0 0.0
  %357 = vmatpush2.xpose.msra.mxu0 0.0
  %358 = vmatprep.subr.mxu0 0.0
  %359 = vmatpush2.xpose.msra.mxu0 0.0
  %360 = vmatprep.subr.mxu0 0.0
  %361 = vmatpush2.xpose.msra.mxu0 0.0
  %362 = vmatprep.subr.mxu0 0.0
  %363 = vmatpush2.xpose.msra.mxu0 0.0
  %364 = vmatprep.subr.mxu0 0.0
  %365 = vmatpush2.xpose.msra.mxu0 0.0
  %366 = vmatprep.subr.mxu0 0.0
  %367 = vmatpush2.xpose.msra.mxu0 0.0
  %368 = vmatprep.subr.mxu0 0.0
  %369 = vmatpush2.xpose.msra.mxu0 0.0
  %370 = vmatprep.subr.mxu0 0.0
  %371 = vmatpush2.xpose.msra.mxu0 0.0
  %372 = vmatprep.subr.mxu0 0.0
  %373 = vmatpush2.xpose.msra.mxu0 0.0
  %374 = vmatprep.mubr.f32.mxu0 0.0
  %375 = vmatmul.mubr.f32.gmra.mxu0 %v303
  %v376 = vpop.f32.mrf.mxu0
  %v377 = vadd.f32 %v308, %v376
  %v378 = vpop.f32.mrf.mxu0
  %379 = vdwg.mxu0
  %vm380 = vcmask 457728
  %381 = vst.msk [vmem:[%s7] sm:$0xff] %vm380, %v377
  // Predicated region
  $region30: #{pan_forward.1} parent=0 // pred_check
    _
  $region31: #{pan_forward.1} parent=0 // pred_check_branch
    %383 = sbr.rel (0) target = $region33
  $region32: #{pan_forward.1} parent=0 // pred_region
    _
  $region33: #{pan_forward.1} parent=0 // pred_fallthru
    _
  // Predicated region
  $region34: #{pan_forward.1} parent=0 // pred_check
    _
  $region35: #{pan_forward.1} parent=0 // pred_check_branch
    %385 = sbr.rel (0) target = $region37
  $region36: #{pan_forward.1} parent=0 // pred_region
    _
  $region37: #{pan_forward.1} parent=0 // pred_fallthru
    _

</llo_original>
